<compile_context>
chip_gen: v6e
topology: v6e:2x2x1
jax: 0.10.0
libtpu: 0.0.40
codegen_flags: <defaults>
</compile_context>

<pallas_src>
import functools
import math

import jax
import jax.numpy as jnp
from jax.experimental import pallas as pl
from jax.experimental.pallas import tpu as pltpu

EPS = 1e-6


def _round_up(v: int, m: int) -> int:
    return (v + m - 1) // m * m


def _residual_kernel(x_ref, bits_ref, alpha_ref, beta_ref, w_ref, b_ref, o_ref,
                     *, dropout_p: float, keep_threshold: int, valid_f: int,
                     use_approx_recip: bool):
    x = x_ref[...].astype(jnp.float32)                      # (TR, Fp)
    fp = x.shape[-1]

    # --- LayerNormalization: alpha * (x - mean) / (std + eps) + bias ----------
    # (unbiased variance, divide by F-1, matching torch.Tensor.std default)
    if valid_f == fp:
        mean = jnp.mean(x, axis=-1, keepdims=True)
        centered = x - mean
    else:
        # Padded lanes (>= valid_f) are zero in x/alpha/beta/W/b, so lane-axis
        # sums over the padded width equal sums over the real features; only
        # the centered term needs explicit masking for the variance.
        lane = jax.lax.broadcasted_iota(jnp.int32, x.shape, 1)
        mean = jnp.sum(x, axis=-1, keepdims=True) * (1.0 / valid_f)
        centered = jnp.where(lane < valid_f, x - mean, 0.0)

    var = jnp.sum(centered * centered, axis=-1, keepdims=True) * (1.0 / (valid_f - 1))
    denom = jnp.sqrt(var) + EPS
    if use_approx_recip:
        inv = pl.reciprocal(denom, approx=True)             # EUP slot (TPU only)
    else:
        inv = 1.0 / denom                                   # interpret-safe path
    normed = alpha_ref[...] * (centered * inv) + beta_ref[...]

    # --- sublayer: Linear(F -> F) on the MXU (bf16 operands, f32 accumulate) --
    y = jnp.dot(normed.astype(w_ref.dtype), w_ref[...],
                preferred_element_type=jnp.float32) + b_ref[...]

    # --- inverted dropout: integer threshold on precomputed random bits -------
    if dropout_p > 0.0:
        keep = bits_ref[...] < jnp.int32(keep_threshold)
        y = jnp.where(keep, y * (1.0 / (1.0 - dropout_p)), 0.0)

    # --- residual add ----------------------------------------------------------
    o_ref[...] = (x + y).astype(o_ref.dtype)


def residual_connection(x, alpha, beta, w, b, *, dropout_p=0.1,
                        dropout_key=None, row_tile=256):
    """x: (B, S, F). alpha/beta: (F,) LayerNorm params. w: (F, F), b: (F,) sublayer."""
    B, S, F = x.shape
    assert F >= 2, "LayerNormalization with unbiased std needs F >= 2"
    rows = B * S

    # Lane-dense features: pad F up to a multiple of 128 (unmasked vector stores).
    Fp = _round_up(F, 128)
    # Large MXU-friendly row tiles, clamped to the (padded) row count; rows are
    # padded so the grid needs no tail masking.
    tr = min(row_tile, _round_up(rows, 8))
    rows_p = _round_up(rows, tr)

    f32 = jnp.float32
    xf = jnp.zeros((rows_p, Fp), f32).at[:rows, :F].set(x.reshape(rows, F).astype(f32))
    alpha_p = jnp.zeros((1, Fp), f32).at[0, :F].set(alpha.astype(f32))
    beta_p = jnp.zeros((1, Fp), f32).at[0, :F].set(beta.astype(f32))
    w_p = jnp.zeros((Fp, Fp), jnp.bfloat16).at[:F, :F].set(w.astype(jnp.bfloat16))
    b_p = jnp.zeros((1, Fp), f32).at[0, :F].set(b.astype(f32))

    if dropout_p > 0.0:
        if dropout_key is None:
            dropout_key = jax.random.PRNGKey(0)
        raw = jax.random.bits(dropout_key, (rows_p, Fp), dtype=jnp.uint32)
        bits = (raw >> jnp.uint32(8)).astype(jnp.int32)      # in [0, 2^24), sign-safe
        keep_threshold = min(int(round((1.0 - dropout_p) * (1 << 24))), 1 << 24)
    else:
        bits = jnp.zeros((rows_p, Fp), jnp.int32)            # unused (static branch)
        keep_threshold = 0

    use_approx_recip = jax.default_backend() == "tpu"

    kernel = functools.partial(
        _residual_kernel,
        dropout_p=float(dropout_p),
        keep_threshold=keep_threshold,
        valid_f=F,
        use_approx_recip=use_approx_recip,
    )

    # Explicit VMEM budget: double-buffered x / bits / out tiles + resident
    # bf16 weight block + broadcast rows, with a little headroom.
    tile_bytes = tr * Fp * 4
    vmem_bytes = (3 * 2 * tile_bytes            # x, bits, out tiles (double-buffered)
                  + 2 * Fp * Fp * 2             # bf16 weight block
                  + 2 * 3 * Fp * 4)             # alpha, beta, bias rows
    vmem_limit = int(min(max(vmem_bytes + (2 << 20), 16 << 20), 64 << 20))

    out = pl.pallas_call(
        kernel,
        out_shape=jax.ShapeDtypeStruct((rows_p, Fp), x.dtype),
        grid_spec=pltpu.PrefetchScalarGridSpec(
            num_scalar_prefetch=0,
            grid=(rows_p // tr,),
            in_specs=[
                pl.BlockSpec((tr, Fp), lambda i: (i, 0)),    # x row tile
                pl.BlockSpec((tr, Fp), lambda i: (i, 0)),    # dropout bits tile
                pl.BlockSpec((1, Fp), lambda i: (0, 0)),     # alpha
                pl.BlockSpec((1, Fp), lambda i: (0, 0)),     # beta
                pl.BlockSpec((Fp, Fp), lambda i: (0, 0)),    # W (resident)
                pl.BlockSpec((1, Fp), lambda i: (0, 0)),     # b
            ],
            out_specs=pl.BlockSpec((tr, Fp), lambda i: (i, 0)),
        ),
        compiler_params=pltpu.CompilerParams(
            dimension_semantics=("parallel",),               # rows independent -> megacore
            vmem_limit_bytes=vmem_limit,
        ),
    )(xf, bits, alpha_p, beta_p, w_p, b_p)

    return out[:rows, :F].reshape(B, S, F).astype(x.dtype)


if __name__ == "__main__":
    B, S, F = 2, 8, 32
    dropout_p = 0.1

    key = jax.random.PRNGKey(0)
    kx, kw, kb, kd = jax.random.split(key, 4)

    x = jax.random.normal(kx, (B, S, F), dtype=jnp.float32)

    # LayerNormalization params (torch init: alpha = ones, bias = zeros)
    alpha = jnp.ones((F,), jnp.float32)
    beta = jnp.zeros((F,), jnp.float32)

    # Deterministic Linear(F, F) sublayer parameters (uniform +-1/sqrt(F))
    limit = 1.0 / math.sqrt(F)
    w = jax.random.uniform(kw, (F, F), jnp.float32, -limit, limit)
    b = jax.random.uniform(kb, (F,), jnp.float32, -limit, limit)

    out = residual_connection(x, alpha, beta, w, b, dropout_p=dropout_p,
                              dropout_key=kd)
    out = jax.block_until_ready(out)
    assert out.shape == (B, S, F) and out.dtype == jnp.float32
    assert bool(jnp.all(jnp.isfinite(out)))
    print("KERNEL_OK")
</pallas_src>

<mosaic_0001>
module attributes {stable_mosaic.version = 11 : i64} {
  func.func @_residual_kernel(%arg0: i32, %arg1: memref<16x128xf32, #tpu.memory_space<vmem>>, %arg2: memref<16x128xi32, #tpu.memory_space<vmem>>, %arg3: memref<1x128xf32, #tpu.memory_space<vmem>>, %arg4: memref<1x128xf32, #tpu.memory_space<vmem>>, %arg5: memref<128x128xbf16, #tpu.memory_space<vmem>>, %arg6: memref<1x128xf32, #tpu.memory_space<vmem>>, %arg7: memref<16x128xf32, #tpu.memory_space<vmem>>) attributes {dimension_semantics = [#tpu.dimension_semantics<parallel>], iteration_bounds = array<i64: 1>, scalar_prefetch = 0 : i64, scratch_operands = 0 : i64, tpu.core_type = #tpu.core_type<tc>, window_params = [{transform_indices = @transform_0, window_bounds = array<i64: 16, 128>}, {transform_indices = @transform_1, window_bounds = array<i64: 16, 128>}, {pipeline_mode = #tpu.pipeline_mode<synchronous>, transform_indices = @transform_2, window_bounds = array<i64: 1, 128>}, {pipeline_mode = #tpu.pipeline_mode<synchronous>, transform_indices = @transform_3, window_bounds = array<i64: 1, 128>}, {pipeline_mode = #tpu.pipeline_mode<synchronous>, transform_indices = @transform_4, window_bounds = array<i64: 128, 128>}, {pipeline_mode = #tpu.pipeline_mode<synchronous>, transform_indices = @transform_5, window_bounds = array<i64: 1, 128>}, {transform_indices = @transform_6, window_bounds = array<i64: 16, 128>}]} {
    %c0 = arith.constant 0 : index
    %c0_0 = arith.constant 0 : index
    %0 = vector.load %arg1[%c0, %c0_0] : memref<16x128xf32, #tpu.memory_space<vmem>>, vector<16x128xf32>
    %1 = tpu.iota {dimensions = array<i32: 1>} : vector<16x128xi32>
    %cst = arith.constant dense<0.000000e+00> : vector<16xf32>
    %2 = vector.multi_reduction <add>, %0, %cst [1] : vector<16x128xf32> to vector<16xf32>
    %3 = vector.shape_cast %2 : vector<16xf32> to vector<16x1xf32>
    %cst_1 = arith.constant 3.125000e-02 : f32
    %4 = vector.broadcast %cst_1 : f32 to vector<16x1xf32>
    %5 = arith.mulf %3, %4 : vector<16x1xf32>
    %c32_i32 = arith.constant 32 : i32
    %6 = vector.broadcast %c32_i32 : i32 to vector<16x128xi32>
    %7 = arith.cmpi slt, %1, %6 : vector<16x128xi32>
    %8 = vector.broadcast %5 : vector<16x1xf32> to vector<16x128xf32>
    %9 = arith.subf %0, %8 : vector<16x128xf32>
    %cst_2 = arith.constant 0.000000e+00 : f32
    %10 = vector.broadcast %cst_2 : f32 to vector<16x128xf32>
    %11 = arith.select %7, %9, %10 : vector<16x128xi1>, vector<16x128xf32>
    %12 = arith.mulf %11, %11 : vector<16x128xf32>
    %cst_3 = arith.constant dense<0.000000e+00> : vector<16xf32>
    %13 = vector.multi_reduction <add>, %12, %cst_3 [1] : vector<16x128xf32> to vector<16xf32>
    %14 = vector.shape_cast %13 : vector<16xf32> to vector<16x1xf32>
    %cst_4 = arith.constant 0.0322580636 : f32
    %15 = vector.broadcast %cst_4 : f32 to vector<16x1xf32>
    %16 = arith.mulf %14, %15 : vector<16x1xf32>
    %17 = math.sqrt %16 : vector<16x1xf32>
    %cst_5 = arith.constant 9.99999997E-7 : f32
    %18 = vector.broadcast %cst_5 : f32 to vector<16x1xf32>
    %19 = arith.addf %17, %18 : vector<16x1xf32>
    %cst_6 = arith.constant 1.000000e+00 : f32
    %20 = vector.broadcast %cst_6 : f32 to vector<16x1xf32>
    %21 = arith.divf %20, %19 : vector<16x1xf32>
    %c0_7 = arith.constant 0 : index
    %c0_8 = arith.constant 0 : index
    %22 = vector.load %arg3[%c0_7, %c0_8] : memref<1x128xf32, #tpu.memory_space<vmem>>, vector<1x128xf32>
    %23 = vector.broadcast %21 : vector<16x1xf32> to vector<16x128xf32>
    %24 = arith.mulf %11, %23 : vector<16x128xf32>
    %25 = vector.broadcast %22 : vector<1x128xf32> to vector<16x128xf32>
    %26 = arith.mulf %25, %24 : vector<16x128xf32>
    %c0_9 = arith.constant 0 : index
    %c0_10 = arith.constant 0 : index
    %27 = vector.load %arg4[%c0_9, %c0_10] : memref<1x128xf32, #tpu.memory_space<vmem>>, vector<1x128xf32>
    %28 = vector.broadcast %27 : vector<1x128xf32> to vector<16x128xf32>
    %29 = arith.addf %26, %28 : vector<16x128xf32>
    %30 = arith.truncf %29 : vector<16x128xf32> to vector<16x128xbf16>
    %c0_11 = arith.constant 0 : index
    %c0_12 = arith.constant 0 : index
    %31 = vector.load %arg5[%c0_11, %c0_12] : memref<128x128xbf16, #tpu.memory_space<vmem>>, vector<128x128xbf16>
    %cst_13 = arith.constant dense<0.000000e+00> : vector<16x128xf32>
    %32 = tpu.matmul %30, %31, %cst_13 {dimension_numbers = #tpu.dot_dimension_numbers<[1], [0], [0], [1], [0, 0, 1, 1], [], []>} : vector<16x128xbf16>, vector<128x128xbf16>, vector<16x128xf32> -> vector<16x128xf32>
    %c0_14 = arith.constant 0 : index
    %c0_15 = arith.constant 0 : index
    %33 = vector.load %arg6[%c0_14, %c0_15] : memref<1x128xf32, #tpu.memory_space<vmem>>, vector<1x128xf32>
    %34 = vector.broadcast %33 : vector<1x128xf32> to vector<16x128xf32>
    %35 = arith.addf %32, %34 : vector<16x128xf32>
    %c0_16 = arith.constant 0 : index
    %c0_17 = arith.constant 0 : index
    %36 = vector.load %arg2[%c0_16, %c0_17] : memref<16x128xi32, #tpu.memory_space<vmem>>, vector<16x128xi32>
    %c15099494_i32 = arith.constant 15099494 : i32
    %37 = vector.broadcast %c15099494_i32 : i32 to vector<16x128xi32>
    %38 = arith.cmpi slt, %36, %37 : vector<16x128xi32>
    %cst_18 = arith.constant 1.11111116 : f32
    %39 = vector.broadcast %cst_18 : f32 to vector<16x128xf32>
    %40 = arith.mulf %35, %39 : vector<16x128xf32>
    %cst_19 = arith.constant 0.000000e+00 : f32
    %41 = vector.broadcast %cst_19 : f32 to vector<16x128xf32>
    %42 = arith.select %38, %40, %41 : vector<16x128xi1>, vector<16x128xf32>
    %43 = arith.addf %0, %42 : vector<16x128xf32>
    %c0_20 = arith.constant 0 : index
    %c0_21 = arith.constant 0 : index
    %44 = vector.load %arg7[%c0_20, %c0_21] : memref<16x128xf32, #tpu.memory_space<vmem>>, vector<16x128xf32>
    tpu.vector_store %arg7[%c0_20, %c0_21], %43 {strides = array<i32>} : memref<16x128xf32, #tpu.memory_space<vmem>>, vector<16x128xf32>,
    return
  }
  func.func @transform_0(%arg0: i32) -> (i32, i32) {
    %c0_i32 = arith.constant 0 : i32
    %c0_i32_0 = arith.constant 0 : i32
    return %arg0, %c0_i32 : i32, i32
  }
  func.func @transform_1(%arg0: i32) -> (i32, i32) {
    %c0_i32 = arith.constant 0 : i32
    %c0_i32_0 = arith.constant 0 : i32
    return %arg0, %c0_i32 : i32, i32
  }
  func.func @transform_2(%arg0: i32) -> (i32, i32) {
    %c0_i32 = arith.constant 0 : i32
    %c0_i32_0 = arith.constant 0 : i32
    %c0_i32_1 = arith.constant 0 : i32
    return %c0_i32, %c0_i32_0 : i32, i32
  }
  func.func @transform_3(%arg0: i32) -> (i32, i32) {
    %c0_i32 = arith.constant 0 : i32
    %c0_i32_0 = arith.constant 0 : i32
    %c0_i32_1 = arith.constant 0 : i32
    return %c0_i32, %c0_i32_0 : i32, i32
  }
  func.func @transform_4(%arg0: i32) -> (i32, i32) {
    %c0_i32 = arith.constant 0 : i32
    %c0_i32_0 = arith.constant 0 : i32
    %c0_i32_1 = arith.constant 0 : i32
    return %c0_i32, %c0_i32_0 : i32, i32
  }
  func.func @transform_5(%arg0: i32) -> (i32, i32) {
    %c0_i32 = arith.constant 0 : i32
    %c0_i32_0 = arith.constant 0 : i32
    %c0_i32_1 = arith.constant 0 : i32
    return %c0_i32, %c0_i32_0 : i32, i32
  }
  func.func @transform_6(%arg0: i32) -> (i32, i32) {
    %c0_i32 = arith.constant 0 : i32
    %c0_i32_0 = arith.constant 0 : i32
    return %arg0, %c0_i32 : i32, i32
  }
}

</mosaic_0001>

<llo_original>
// kernel: tpu_custom_call.1
$region0: #{tpu_custom_call.1}
  #allocation0 [shape = 'u32[]', space=smem, size = 0x4, offset = 0x4, fixed_abs, tag = 'smem constant byte address 0x4 - core index']
  #allocation1 [shape = 'u32[144,128]{1,0:T(1,128)}', space=vmem, size = 0x12000, scoped, tag = 'internal scratch']
  %s0 = inlined_call_operand.hbm [shape: f32[16,128], index: 0, kind: input, shape index: {}]
  %s1 = inlined_call_operand.hbm [shape: s32[16,128], index: 1, kind: input, shape index: {}]
  %s2 = inlined_call_operand.vmem [shape: f32[1,128], index: 2, kind: input, shape index: {}]
  %s3 = inlined_call_operand.vmem [shape: f32[1,128], index: 3, kind: input, shape index: {}]
  %s4 = inlined_call_operand.hbm [shape: bf16[128,128], index: 4, kind: input, shape index: {}]
  %s5 = inlined_call_operand.vmem [shape: f32[1,128], index: 5, kind: input, shape index: {}]
  %s6 = inlined_call_operand.hbm [shape: f32[16,128], index: 6, kind: output, shape index: {}]
  %s7 = sld [smem:[#allocation0]]
  $region46: #{tpu_custom_call.1} parent=0
    _
  %s9 = ssub.s32 1, %s7
  %s10 = scalar_select 0, %s9, %s7
  $region1: #{tpu_custom_call.1} parent=0
    #allocation2 [shape = 'u8[8192]{0}', space=vmem, size = 0x2000, scoped, tag = 'input window, operand 0, single buffered']
    #allocation3 [shape = 's32[1]{0}', space=sflag, size = 0x4, scoped, tag = 'scoped memory for tpu_custom_call.1']
    #allocation4 [shape = 's32[1]{0}', space=sflag, size = 0x4, scoped, tag = 'scoped memory for tpu_custom_call.1']
    #allocation5 [shape = 'u8[8192]{0}', space=vmem, size = 0x2000, scoped, tag = 'input window, operand 1, single buffered']
    #allocation6 [shape = 's32[1]{0}', space=sflag, size = 0x4, scoped, tag = 'scoped memory for tpu_custom_call.1']
    #allocation7 [shape = 'u8[32768]{0}', space=vmem, size = 0x8000, scoped, tag = 'input window, operand 4, single buffered']
    #allocation8 [shape = 'u8[8192]{0}', space=vmem, size = 0x2000, scoped, tag = 'output window, operand 0, single buffered']
    %11 = vsyncpa [#allocation3], 0
    %12 = vsyncpa [#allocation6], 0
    %13 = vsyncpa [#allocation4], 0
    // Predicated region
    $region2: #{tpu_custom_call.1} parent=1 // pred_check
      _
    $region3: #{tpu_custom_call.1} parent=1 // pred_check_branch
      %15 = sbr.rel (0) target = $region5
    $region4: #{tpu_custom_call.1} parent=1 // pred_region
      %s17 = ssub.s32 256, 256
      %18 = vsyncadd [#allocation3], %s17
      %s19 = sshll.u32 [#allocation2], 4
      %s20 = int_to_ptr.vmem [resolvable:$true] %s19
      %25 = dma.hbm_to_vmem [thread:$0]  %s0, 256, %s20, [#allocation3], 128, 128, 8
    $region5: #{tpu_custom_call.1} parent=1 // pred_fallthru
      _
    // Predicated region
    $region6: #{tpu_custom_call.1} parent=1 // pred_check
      _
    $region7: #{tpu_custom_call.1} parent=1 // pred_check_branch
      %27 = sbr.rel (0) target = $region9
    $region8: #{tpu_custom_call.1} parent=1 // pred_region
      %s29 = ssub.s32 256, 256
      %30 = vsyncadd [#allocation6], %s29
      %s31 = sshll.u32 [#allocation5], 4
      %s32 = int_to_ptr.vmem [resolvable:$true] %s31
      %37 = dma.hbm_to_vmem [thread:$0]  %s1, 256, %s32, [#allocation6], 128, 128, 8
    $region9: #{tpu_custom_call.1} parent=1 // pred_fallthru
      _
    // Predicated region
    $region10: #{tpu_custom_call.1} parent=1 // pred_check
      _
    $region11: #{tpu_custom_call.1} parent=1 // pred_check_branch
      %39 = sbr.rel (0) target = $region13
    $region12: #{tpu_custom_call.1} parent=1 // pred_region
      _
    $region13: #{tpu_custom_call.1} parent=1 // pred_fallthru
      _
    // Predicated region
    $region14: #{tpu_custom_call.1} parent=1 // pred_check
      _
    $region15: #{tpu_custom_call.1} parent=1 // pred_check_branch
      %41 = sbr.rel (0) target = $region17
    $region16: #{tpu_custom_call.1} parent=1 // pred_region
      _
    $region17: #{tpu_custom_call.1} parent=1 // pred_fallthru
      _
    // Predicated region
    $region18: #{tpu_custom_call.1} parent=1 // pred_check
      _
    $region19: #{tpu_custom_call.1} parent=1 // pred_check_branch
      %43 = sbr.rel (0) target = $region21
    $region20: #{tpu_custom_call.1} parent=1 // pred_region
      %s45 = ssub.s32 1024, 1024
      %46 = vsyncadd [#allocation6], %s45
      %s47 = sshll.u32 [#allocation7], 4
      %s48 = int_to_ptr.vmem [resolvable:$true] %s47
      %53 = dma.hbm_to_vmem [thread:$0]  %s4, 1024, %s48, [#allocation6], 64, 64, 4
    $region21: #{tpu_custom_call.1} parent=1 // pred_fallthru
      _
    // Predicated region
    $region22: #{tpu_custom_call.1} parent=1 // pred_check
      _
    $region23: #{tpu_custom_call.1} parent=1 // pred_check_branch
      %55 = sbr.rel (0) target = $region25
    $region24: #{tpu_custom_call.1} parent=1 // pred_region
      _
    $region25: #{tpu_custom_call.1} parent=1 // pred_fallthru
      _
    // Predicated region
    $region26: #{tpu_custom_call.1} parent=1 // pred_check
      _
    $region27: #{tpu_custom_call.1} parent=1 // pred_check_branch
      %57 = sbr.rel (0) target = $region29
    $region28: #{tpu_custom_call.1} parent=1 // pred_region
      %58 = dma.done [#allocation3], 256
    $region29: #{tpu_custom_call.1} parent=1 // pred_fallthru
      _
    // Predicated region
    $region30: #{tpu_custom_call.1} parent=1 // pred_check
      _
    $region31: #{tpu_custom_call.1} parent=1 // pred_check_branch
      %60 = sbr.rel (0) target = $region33
    $region32: #{tpu_custom_call.1} parent=1 // pred_region
      %61 = dma.done [#allocation6], 256
    $region33: #{tpu_custom_call.1} parent=1 // pred_fallthru
      _
    // Predicated region
    $region34: #{tpu_custom_call.1} parent=1 // pred_check
      _
    $region35: #{tpu_custom_call.1} parent=1 // pred_check_branch
      %63 = sbr.rel (0) target = $region37
    $region36: #{tpu_custom_call.1} parent=1 // pred_region
      %64 = dma.done [#allocation6], 1024
    $region37: #{tpu_custom_call.1} parent=1 // pred_fallthru
      _
    %v66 = vld [vmem:[#allocation2] sm:$0xff]
    %v67 = vld [vmem:[#allocation2 + $0x8] sm:$0xff]
    %v68 = vlaneseq
    %v69 = vand.u32 %v68, 127
    %70 = vadd.xlane.f32.xlu0 %v66
    %v71 = vpop.xlane.xlu0 %70
    %72 = vadd.xlane.f32.xlu0 %v67
    %v73 = vpop.xlane.xlu0 %72
    %v74 = vmul.f32 %v71, 0.03125
    %v75 = vmul.f32 %v73, 0.03125
    %vm76 = vcmp.lt.s32.totalorder %v69, 32
    %v77 = vsub.f32 %v66, %v74
    %v78 = vsub.f32 %v67, %v75
    %v79 = vsel %vm76, %v77, 0.0
    %v80 = vsel %vm76, %v78, 0.0
    %v81 = vmul.f32 %v79, %v79
    %v82 = vmul.f32 %v80, %v80
    %83 = vadd.xlane.f32.xlu0 %v81
    %v84 = vpop.xlane.xlu0 %83
    %85 = vadd.xlane.f32.xlu0 %v82
    %v86 = vpop.xlane.xlu0 %85
    %v87 = vmul.f32 %v84, 0.032258064
    %v88 = vmul.f32 %v86, 0.032258064
    %v89 = vrsqrt.pop %v87
    %v90 = vmul.f32 %v87, %v89
    %vm91 = vcmp.eq.f32.partialorder %v87, inf
    %v92 = vsel %vm91, %v87, %v90
    %vm93 = vcmp.eq.f32.partialorder %v87, 0.0
    %v94 = vand.u32 %v87, 2147483648
    %v95 = vsel %vm93, %v94, %v92
    %v96 = vrsqrt.pop %v88
    %v97 = vmul.f32 %v88, %v96
    %vm98 = vcmp.eq.f32.partialorder %v88, inf
    %v99 = vsel %vm98, %v88, %v97
    %vm100 = vcmp.eq.f32.partialorder %v88, 0.0
    %v101 = vand.u32 %v88, 2147483648
    %v102 = vsel %vm100, %v101, %v99
    %v103 = vadd.f32 %v95, 1e-06
    %v104 = vadd.f32 %v102, 1e-06
    %v105 = vrcp.pop %v103
    %v106 = vmul.f32 1.0, %v105
    %v107 = vrcp.pop %v104
    %v108 = vmul.f32 1.0, %v107
    %v109 = vld [vmem:[%s2] sm:$0x1]
    %v110 = vmul.f32 %v79, %v106
    %v111 = vmul.f32 %v80, %v108
    %v113 = vlaneseq
    %v114 = vshrl.u32 %v113, 7
    %v115 = vsub.s32 0, %v114
    %v116 = vrot.slane %v109, %v115
    %v118 = vmul.f32 %v116, %v110
    %v119 = vmul.f32 %v116, %v111
    %v120 = vld [vmem:[%s3] sm:$0x1]
    %v122 = vlaneseq
    %v123 = vshrl.u32 %v122, 7
    %v124 = vsub.s32 0, %v123
    %v125 = vrot.slane %v120, %v124
    %v127 = vadd.f32 %v118, %v125
    %v128 = vadd.f32 %v119, %v125
    %v129 = vpack.c.bf16 %v128, %v127
    %v130 = vld [vmem:[#allocation7] sm:$0xf]
    %v131 = vld [vmem:[#allocation7 + $0x4] sm:$0xf]
    %v132 = vld [vmem:[#allocation7 + $0x8] sm:$0xf]
    %v133 = vld [vmem:[#allocation7 + $0xc] sm:$0xf]
    %v134 = vld [vmem:[#allocation7 + $0x10] sm:$0xf]
    %v135 = vld [vmem:[#allocation7 + $0x14] sm:$0xf]
    %v136 = vld [vmem:[#allocation7 + $0x18] sm:$0xf]
    %v137 = vld [vmem:[#allocation7 + $0x1c] sm:$0xf]
    %v138 = vld [vmem:[#allocation7 + $0x20] sm:$0xf]
    %v139 = vld [vmem:[#allocation7 + $0x24] sm:$0xf]
    %v140 = vld [vmem:[#allocation7 + $0x28] sm:$0xf]
    %v141 = vld [vmem:[#allocation7 + $0x2c] sm:$0xf]
    %v142 = vld [vmem:[#allocation7 + $0x30] sm:$0xf]
    %v143 = vld [vmem:[#allocation7 + $0x34] sm:$0xf]
    %v144 = vld [vmem:[#allocation7 + $0x38] sm:$0xf]
    %v145 = vld [vmem:[#allocation7 + $0x3c] sm:$0xf]
    %v146 = vld [vmem:[%s5] sm:$0x1]
    %v148 = vlaneseq
    %v149 = vshrl.u32 %v148, 7
    %v150 = vsub.s32 0, %v149
    %v151 = vrot.slane %v146, %v150
    %v169 = vunpack.c.l.b16 %v130
    %v170 = vunpack.c.l.b16 %v131
    %v171 = vunpack.c.l.b16 %v132
    %v172 = vunpack.c.l.b16 %v133
    %v173 = vunpack.c.l.b16 %v134
    %v174 = vunpack.c.l.b16 %v135
    %v175 = vunpack.c.l.b16 %v136
    %v176 = vunpack.c.l.b16 %v137
    %v177 = vunpack.c.l.b16 %v138
    %v178 = vunpack.c.l.b16 %v139
    %v179 = vunpack.c.l.b16 %v140
    %v180 = vunpack.c.l.b16 %v141
    %v181 = vunpack.c.l.b16 %v142
    %v182 = vunpack.c.l.b16 %v143
    %v183 = vunpack.c.l.b16 %v144
    %v184 = vunpack.c.l.b16 %v145
    %v185 = vpack.c.b16 %v170, %v169
    %v186 = vpack.c.b16 %v172, %v171
    %v187 = vpack.c.b16 %v174, %v173
    %v188 = vpack.c.b16 %v176, %v175
    %v189 = vpack.c.b16 %v178, %v177
    %v190 = vpack.c.b16 %v180, %v179
    %v191 = vpack.c.b16 %v182, %v181
    %v192 = vpack.c.b16 %v184, %v183
    %201 = vmatprep.subr.bf16.mxu0 0
    %202 = vmatpush1.bf16.msra.mxu0 %v192
    %203 = vmatprep.subr.bf16.mxu0 0
    %204 = vmatpush1.bf16.msra.mxu0 %v191
    %205 = vmatprep.subr.bf16.mxu0 0
    %206 = vmatpush1.bf16.msra.mxu0 %v190
    %207 = vmatprep.subr.bf16.mxu0 0
    %208 = vmatpush1.bf16.msra.mxu0 %v189
    %209 = vmatprep.subr.bf16.mxu0 0
    %210 = vmatpush1.bf16.msra.mxu0 %v188
    %211 = vmatprep.subr.bf16.mxu0 0
    %212 = vmatpush1.bf16.msra.mxu0 %v187
    %213 = vmatprep.subr.bf16.mxu0 0
    %214 = vmatpush1.bf16.msra.mxu0 %v186
    %215 = vmatprep.subr.bf16.mxu0 0
    %216 = vmatpush1.bf16.msra.mxu0 %v185
    %217 = vmatprep.subr.bf16.mxu0 0
    %218 = vmatpush2.bf16.msra.mxu0 0
    %219 = vmatprep.subr.bf16.mxu0 0
    %220 = vmatpush2.bf16.msra.mxu0 0
    %221 = vmatprep.subr.bf16.mxu0 0
    %222 = vmatpush2.bf16.msra.mxu0 0
    %223 = vmatprep.subr.bf16.mxu0 0
    %224 = vmatpush2.bf16.msra.mxu0 0
    %225 = vmatprep.subr.bf16.mxu0 0
    %226 = vmatpush2.bf16.msra.mxu0 0
    %227 = vmatprep.subr.bf16.mxu0 0
    %228 = vmatpush2.bf16.msra.mxu0 0
    %229 = vmatprep.subr.bf16.mxu0 0
    %230 = vmatpush2.bf16.msra.mxu0 0
    %231 = vmatprep.subr.bf16.mxu0 0
    %232 = vmatpush2.bf16.msra.mxu0 0
    %233 = vmatprep.mubr.bf16.mxu0 0
    %234 = vmatmul.mubr.bf16.gmra.mxu0 %v129
    %v235 = vpop.f32.mrf.mxu0
    %v236 = vadd.f32 %v151, %v235
    %v237 = vpop.f32.mrf.mxu0
    %v238 = vpop.f32.mrf.mxu0
    %v239 = vadd.f32 %v151, %v238
    %v240 = vpop.f32.mrf.mxu0
    %241 = vdwg.mxu0
    %v242 = vld [vmem:[#allocation5] sm:$0xff]
    %v243 = vld [vmem:[#allocation5 + $0x8] sm:$0xff]
    %vm244 = vcmp.lt.s32.totalorder %v242, 15099494
    %vm245 = vcmp.lt.s32.totalorder %v243, 15099494
    %v246 = vmul.f32 %v236, 1.1111112
    %v247 = vmul.f32 %v239, 1.1111112
    %v248 = vsel %vm244, %v246, 0.0
    %v249 = vsel %vm245, %v247, 0.0
    %v250 = vadd.f32 %v66, %v248
    %v251 = vadd.f32 %v67, %v249
    %252 = vst [vmem:[#allocation8] sm:$0xff] %v250
    %253 = vst [vmem:[#allocation8 + $0x8] sm:$0xff] %v251
    // Predicated region
    $region38: #{tpu_custom_call.1} parent=1 // pred_check
      _
    $region39: #{tpu_custom_call.1} parent=1 // pred_check_branch
      %255 = sbr.rel (0) target = $region41
    $region40: #{tpu_custom_call.1} parent=1 // pred_region
      %s257 = ssub.s32 256, 256
      %258 = vsyncadd [#allocation4], %s257
      %s259 = sshll.u32 [#allocation8], 4
      %s260 = int_to_ptr.vmem [resolvable:$true] %s259
      %265 = dma.vmem_to_hbm [thread:$0]  %s260, 256, %s6, [#allocation4], 128, 128, 8
    $region41: #{tpu_custom_call.1} parent=1 // pred_fallthru
      _
    // Predicated region
    $region42: #{tpu_custom_call.1} parent=1 // pred_check
      _
    $region43: #{tpu_custom_call.1} parent=1 // pred_check_branch
      %267 = sbr.rel (0) target = $region45
    $region44: #{tpu_custom_call.1} parent=1 // pred_region
      %268 = dma.done [#allocation4], 256
    $region45: #{tpu_custom_call.1} parent=1 // pred_fallthru
      _
    %269 = vsyncpa [#allocation3], 1
    %270 = vsyncpa [#allocation6], 1
    %271 = vsyncpa [#allocation4], 1

</llo_original>
